<compile_context>
chip_gen: v6e
topology: v6e:2x2x1
jax: 0.10.0
libtpu: 0.0.40
codegen_flags: <defaults>
</compile_context>

<pallas_src>
import jax
import jax.numpy as jnp
from jax.experimental import pallas as pl
from jax.experimental.pallas import tpu as pltpu


_ACTIVATIONS = {
    "relu": lambda h: jnp.maximum(h, 0.0),
    "tanh": jnp.tanh,
    "sigmoid": jax.nn.sigmoid,
}


def mlp_forward(x, params, *, batch_tile=512, activation="relu"):
    """Fused MLP forward.

    x:      [B, input_size] float32
    params: (w1, b1, w2, b2, ..., wn, bn) with w_l in PyTorch layout
            [out_l, in_l] and b_l as a column [out_l, 1].
    Returns [B, output_size] in x.dtype.
    """
    act = _ACTIVATIONS[activation]
    n_layers = len(params) // 2
    B, in_dim = x.shape
    out_dim = params[-2].shape[0]

    # Put batch in the lane dim and pad it to a multiple of batch_tile.
    num_tiles = pl.cdiv(B, batch_tile)
    b_pad = num_tiles * batch_tile
    x_t = x.T  # [in_dim, B]  (wrapper-side layout plumbing, not compute)
    if b_pad != B:
        x_t = jnp.pad(x_t, ((0, 0), (0, b_pad - B)))

    def kernel(x_ref, *refs):
        o_ref = refs[-1]
        wb = refs[:-1]
        h = x_ref[...]                                   # [in_dim, bt] f32
        for layer in range(n_layers):
            w = wb[2 * layer][...]                       # [out_l, in_l]
            b = wb[2 * layer + 1][...]                   # [out_l, 1]
            h = jnp.dot(w, h, preferred_element_type=jnp.float32) + b
            if layer < n_layers - 1:                     # no act on output layer
                h = act(h)
        o_ref[...] = h.astype(o_ref.dtype)               # lane-dense store

    # Weights/biases: whole-array residents in VMEM, loaded once (no per-step
    # grid blocking / DMA descriptors).
    weight_specs = [
        pl.BlockSpec(memory_space=pltpu.MemorySpace.VMEM) for _ in params
    ]

    y_t = pl.pallas_call(
        kernel,
        out_shape=jax.ShapeDtypeStruct((out_dim, b_pad), x.dtype),
        grid_spec=pltpu.PrefetchScalarGridSpec(
            num_scalar_prefetch=0,
            grid=(num_tiles,),
            in_specs=[pl.BlockSpec((in_dim, batch_tile), lambda i: (0, i))]
            + weight_specs,
            out_specs=pl.BlockSpec((out_dim, batch_tile), lambda i: (0, i)),
        ),
        compiler_params=pltpu.CompilerParams(
            # Batch tiles are independent -> shard across the 2 TCs on v7x.
            dimension_semantics=("parallel",),
        ),
    )(x_t, *params)

    return y_t[:, :B].T


def init_params(key, input_size, hidden_sizes, output_size):
    """Deterministic synthetic parameters in PyTorch nn.Linear layout."""
    sizes = [input_size] + list(hidden_sizes) + [output_size]
    params = []
    for i in range(len(sizes) - 1):
        key, wk, bk = jax.random.split(key, 3)
        fan_in, fan_out = sizes[i], sizes[i + 1]
        w = jax.random.normal(wk, (fan_out, fan_in), jnp.float32) / jnp.sqrt(fan_in)
        b = 0.01 * jax.random.normal(bk, (fan_out, 1), jnp.float32)
        params.extend([w, b])
    return tuple(params)


def mlp_reference(x, params, activation="relu"):
    """Pure-JAX reference of the PyTorch forward pass."""
    act = _ACTIVATIONS[activation]
    n_layers = len(params) // 2
    h = x
    for layer in range(n_layers):
        w, b = params[2 * layer], params[2 * layer + 1]
        h = h @ w.T + b[:, 0]
        if layer < n_layers - 1:
            h = act(h)
    return h


if __name__ == "__main__":
    key = jax.random.PRNGKey(0)
    input_size, hidden_sizes, output_size = 4, [32, 32], 2

    pkey, xkey, x2key = jax.random.split(key, 3)
    params = init_params(pkey, input_size, hidden_sizes, output_size)

    # Small demo batch, consistent with MLP(4, [32, 32], 2); padded to the
    # lane-dense tile inside the wrapper.
    batch = 8
    x = jax.random.normal(xkey, (batch, input_size), jnp.float32)

    y = mlp_forward(x, params)
    y = jax.block_until_ready(y)
    y_ref = mlp_reference(x, params)
    assert y.shape == (batch, output_size)
    assert jnp.allclose(y, y_ref, atol=1e-5, rtol=1e-5), "mismatch vs reference"

    # Also exercise the padded, multi-tile (grid > 1) path with a batch that
    # is not a multiple of the tile.
    x_big = jax.random.normal(x2key, (1030, input_size), jnp.float32)
    y_big = jax.block_until_ready(mlp_forward(x_big, params, batch_tile=512))
    assert jnp.allclose(y_big, mlp_reference(x_big, params), atol=1e-5, rtol=1e-5)

    print("KERNEL_OK")
</pallas_src>

<mosaic_0001>
module attributes {stable_mosaic.version = 11 : i64} {
  func.func @kernel(%arg0: i32, %arg1: memref<4x512xf32, #tpu.memory_space<vmem>>, %arg2: memref<32x4xf32, #tpu.memory_space<vmem>>, %arg3: memref<32x1xf32, #tpu.memory_space<vmem>>, %arg4: memref<32x32xf32, #tpu.memory_space<vmem>>, %arg5: memref<32x1xf32, #tpu.memory_space<vmem>>, %arg6: memref<2x32xf32, #tpu.memory_space<vmem>>, %arg7: memref<2x1xf32, #tpu.memory_space<vmem>>, %arg8: memref<2x512xf32, #tpu.memory_space<vmem>>) attributes {dimension_semantics = [#tpu.dimension_semantics<parallel>], iteration_bounds = array<i64: 1>, scalar_prefetch = 0 : i64, scratch_operands = 0 : i64, tpu.core_type = #tpu.core_type<tc>, window_params = [{transform_indices = @transform_0, window_bounds = array<i64: 4, 512>}, {pipeline_mode = #tpu.pipeline_mode<synchronous>, transform_indices = @transform_1, window_bounds = array<i64: 32, 4>}, {pipeline_mode = #tpu.pipeline_mode<synchronous>, transform_indices = @transform_2, window_bounds = array<i64: 32, 1>}, {pipeline_mode = #tpu.pipeline_mode<synchronous>, transform_indices = @transform_3, window_bounds = array<i64: 32, 32>}, {pipeline_mode = #tpu.pipeline_mode<synchronous>, transform_indices = @transform_4, window_bounds = array<i64: 32, 1>}, {pipeline_mode = #tpu.pipeline_mode<synchronous>, transform_indices = @transform_5, window_bounds = array<i64: 2, 32>}, {pipeline_mode = #tpu.pipeline_mode<synchronous>, transform_indices = @transform_6, window_bounds = array<i64: 2, 1>}, {transform_indices = @transform_7, window_bounds = array<i64: 2, 512>}]} {
    %c0 = arith.constant 0 : index
    %c0_0 = arith.constant 0 : index
    %0 = vector.load %arg1[%c0, %c0_0] : memref<4x512xf32, #tpu.memory_space<vmem>>, vector<4x512xf32>
    %c0_1 = arith.constant 0 : index
    %c0_2 = arith.constant 0 : index
    %1 = vector.load %arg2[%c0_1, %c0_2] : memref<32x4xf32, #tpu.memory_space<vmem>>, vector<32x4xf32>
    %c0_3 = arith.constant 0 : index
    %c0_4 = arith.constant 0 : index
    %2 = vector.load %arg3[%c0_3, %c0_4] : memref<32x1xf32, #tpu.memory_space<vmem>>, vector<32x1xf32>
    %cst = arith.constant dense<0.000000e+00> : vector<32x512xf32>
    %3 = tpu.matmul %1, %0, %cst {dimension_numbers = #tpu.dot_dimension_numbers<[1], [0], [0], [1], [0, 0, 1, 1], [], []>} : vector<32x4xf32>, vector<4x512xf32>, vector<32x512xf32> -> vector<32x512xf32>
    %4 = vector.broadcast %2 : vector<32x1xf32> to vector<32x512xf32>
    %5 = arith.addf %3, %4 : vector<32x512xf32>
    %cst_5 = arith.constant 0.000000e+00 : f32
    %6 = vector.broadcast %cst_5 : f32 to vector<32x512xf32>
    %7 = arith.maximumf %5, %6 : vector<32x512xf32>
    %c0_6 = arith.constant 0 : index
    %c0_7 = arith.constant 0 : index
    %8 = vector.load %arg4[%c0_6, %c0_7] : memref<32x32xf32, #tpu.memory_space<vmem>>, vector<32x32xf32>
    %c0_8 = arith.constant 0 : index
    %c0_9 = arith.constant 0 : index
    %9 = vector.load %arg5[%c0_8, %c0_9] : memref<32x1xf32, #tpu.memory_space<vmem>>, vector<32x1xf32>
    %cst_10 = arith.constant dense<0.000000e+00> : vector<32x512xf32>
    %10 = tpu.matmul %8, %7, %cst_10 {dimension_numbers = #tpu.dot_dimension_numbers<[1], [0], [0], [1], [0, 0, 1, 1], [], []>} : vector<32x32xf32>, vector<32x512xf32>, vector<32x512xf32> -> vector<32x512xf32>
    %11 = vector.broadcast %9 : vector<32x1xf32> to vector<32x512xf32>
    %12 = arith.addf %10, %11 : vector<32x512xf32>
    %cst_11 = arith.constant 0.000000e+00 : f32
    %13 = vector.broadcast %cst_11 : f32 to vector<32x512xf32>
    %14 = arith.maximumf %12, %13 : vector<32x512xf32>
    %c0_12 = arith.constant 0 : index
    %c0_13 = arith.constant 0 : index
    %15 = vector.load %arg6[%c0_12, %c0_13] : memref<2x32xf32, #tpu.memory_space<vmem>>, vector<2x32xf32>
    %c0_14 = arith.constant 0 : index
    %c0_15 = arith.constant 0 : index
    %16 = vector.load %arg7[%c0_14, %c0_15] : memref<2x1xf32, #tpu.memory_space<vmem>>, vector<2x1xf32>
    %cst_16 = arith.constant dense<0.000000e+00> : vector<2x512xf32>
    %17 = tpu.matmul %15, %14, %cst_16 {dimension_numbers = #tpu.dot_dimension_numbers<[1], [0], [0], [1], [0, 0, 1, 1], [], []>} : vector<2x32xf32>, vector<32x512xf32>, vector<2x512xf32> -> vector<2x512xf32>
    %18 = vector.broadcast %16 : vector<2x1xf32> to vector<2x512xf32>
    %19 = arith.addf %17, %18 : vector<2x512xf32>
    %c0_17 = arith.constant 0 : index
    %c0_18 = arith.constant 0 : index
    %20 = vector.load %arg8[%c0_17, %c0_18] : memref<2x512xf32, #tpu.memory_space<vmem>>, vector<2x512xf32>
    tpu.vector_store %arg8[%c0_17, %c0_18], %19 {strides = array<i32>} : memref<2x512xf32, #tpu.memory_space<vmem>>, vector<2x512xf32>,
    return
  }
  func.func @transform_0(%arg0: i32) -> (i32, i32) {
    %c0_i32 = arith.constant 0 : i32
    %c0_i32_0 = arith.constant 0 : i32
    return %c0_i32, %arg0 : i32, i32
  }
  func.func @transform_1(%arg0: i32) -> (i32, i32) {
    %c0_i32 = arith.constant 0 : i32
    %c0_i32_0 = arith.constant 0 : i32
    %c0_i32_1 = arith.constant 0 : i32
    return %c0_i32, %c0_i32_0 : i32, i32
  }
  func.func @transform_2(%arg0: i32) -> (i32, i32) {
    %c0_i32 = arith.constant 0 : i32
    %c0_i32_0 = arith.constant 0 : i32
    %c0_i32_1 = arith.constant 0 : i32
    return %c0_i32, %c0_i32_0 : i32, i32
  }
  func.func @transform_3(%arg0: i32) -> (i32, i32) {
    %c0_i32 = arith.constant 0 : i32
    %c0_i32_0 = arith.constant 0 : i32
    %c0_i32_1 = arith.constant 0 : i32
    return %c0_i32, %c0_i32_0 : i32, i32
  }
  func.func @transform_4(%arg0: i32) -> (i32, i32) {
    %c0_i32 = arith.constant 0 : i32
    %c0_i32_0 = arith.constant 0 : i32
    %c0_i32_1 = arith.constant 0 : i32
    return %c0_i32, %c0_i32_0 : i32, i32
  }
  func.func @transform_5(%arg0: i32) -> (i32, i32) {
    %c0_i32 = arith.constant 0 : i32
    %c0_i32_0 = arith.constant 0 : i32
    %c0_i32_1 = arith.constant 0 : i32
    return %c0_i32, %c0_i32_0 : i32, i32
  }
  func.func @transform_6(%arg0: i32) -> (i32, i32) {
    %c0_i32 = arith.constant 0 : i32
    %c0_i32_0 = arith.constant 0 : i32
    %c0_i32_1 = arith.constant 0 : i32
    return %c0_i32, %c0_i32_0 : i32, i32
  }
  func.func @transform_7(%arg0: i32) -> (i32, i32) {
    %c0_i32 = arith.constant 0 : i32
    %c0_i32_0 = arith.constant 0 : i32
    return %c0_i32, %arg0 : i32, i32
  }
}

</mosaic_0001>

<llo_original>
// kernel: tpu_custom_call.1
$region0: #{tpu_custom_call.1}
  #allocation0 [shape = 'u32[]', space=smem, size = 0x4, offset = 0x4, fixed_abs, tag = 'smem constant byte address 0x4 - core index']
  #allocation1 [shape = 'u32[144,128]{1,0:T(1,128)}', space=vmem, size = 0x12000, scoped, tag = 'internal scratch']
  %s0 = inlined_call_operand.vmem [shape: f32[4,512], index: 0, kind: input, shape index: {}]
  %s1 = inlined_call_operand.vmem [shape: f32[32,4], index: 1, kind: input, shape index: {}]
  %s2 = inlined_call_operand.vmem [shape: f32[32,1], index: 2, kind: input, shape index: {}]
  %s3 = inlined_call_operand.vmem [shape: f32[32,32], index: 3, kind: input, shape index: {}]
  %s4 = inlined_call_operand.vmem [shape: f32[32,1], index: 4, kind: input, shape index: {}]
  %s5 = inlined_call_operand.vmem [shape: f32[2,32], index: 5, kind: input, shape index: {}]
  %s6 = inlined_call_operand.vmem [shape: f32[2,1], index: 6, kind: input, shape index: {}]
  %s7 = inlined_call_operand.hbm [shape: f32[2,512], index: 7, kind: output, shape index: {}]
  %s8 = sld [smem:[#allocation0]]
  $region38: #{tpu_custom_call.1} parent=0
    _
  %s10 = ssub.s32 1, %s8
  %s11 = scalar_select 0, %s10, %s8
  $region1: #{tpu_custom_call.1} parent=0
    #allocation2 [shape = 'u8[4096]{0}', space=vmem, size = 0x1000, scoped, tag = 'output window, operand 0, single buffered']
    #allocation3 [shape = 's32[1]{0}', space=sflag, size = 0x4, scoped, tag = 'scoped memory for tpu_custom_call.1']
    %12 = vsyncpa [#allocation3], 0
    // Predicated region
    $region2: #{tpu_custom_call.1} parent=1 // pred_check
      _
    $region3: #{tpu_custom_call.1} parent=1 // pred_check_branch
      %14 = sbr.rel (0) target = $region5
    $region4: #{tpu_custom_call.1} parent=1 // pred_region
      _
    $region5: #{tpu_custom_call.1} parent=1 // pred_fallthru
      _
    // Predicated region
    $region6: #{tpu_custom_call.1} parent=1 // pred_check
      _
    $region7: #{tpu_custom_call.1} parent=1 // pred_check_branch
      %16 = sbr.rel (0) target = $region9
    $region8: #{tpu_custom_call.1} parent=1 // pred_region
      _
    $region9: #{tpu_custom_call.1} parent=1 // pred_fallthru
      _
    // Predicated region
    $region10: #{tpu_custom_call.1} parent=1 // pred_check
      _
    $region11: #{tpu_custom_call.1} parent=1 // pred_check_branch
      %18 = sbr.rel (0) target = $region13
    $region12: #{tpu_custom_call.1} parent=1 // pred_region
      _
    $region13: #{tpu_custom_call.1} parent=1 // pred_fallthru
      _
    // Predicated region
    $region14: #{tpu_custom_call.1} parent=1 // pred_check
      _
    $region15: #{tpu_custom_call.1} parent=1 // pred_check_branch
      %20 = sbr.rel (0) target = $region17
    $region16: #{tpu_custom_call.1} parent=1 // pred_region
      _
    $region17: #{tpu_custom_call.1} parent=1 // pred_fallthru
      _
    // Predicated region
    $region18: #{tpu_custom_call.1} parent=1 // pred_check
      _
    $region19: #{tpu_custom_call.1} parent=1 // pred_check_branch
      %22 = sbr.rel (0) target = $region21
    $region20: #{tpu_custom_call.1} parent=1 // pred_region
      _
    $region21: #{tpu_custom_call.1} parent=1 // pred_fallthru
      _
    // Predicated region
    $region22: #{tpu_custom_call.1} parent=1 // pred_check
      _
    $region23: #{tpu_custom_call.1} parent=1 // pred_check_branch
      %24 = sbr.rel (0) target = $region25
    $region24: #{tpu_custom_call.1} parent=1 // pred_region
      _
    $region25: #{tpu_custom_call.1} parent=1 // pred_fallthru
      _
    // Predicated region
    $region26: #{tpu_custom_call.1} parent=1 // pred_check
      _
    $region27: #{tpu_custom_call.1} parent=1 // pred_check_branch
      %26 = sbr.rel (0) target = $region29
    $region28: #{tpu_custom_call.1} parent=1 // pred_region
      _
    $region29: #{tpu_custom_call.1} parent=1 // pred_fallthru
      _
    %v27 = vld [vmem:[%s0] sm:$0xff]
    %v28 = vld [vmem:[%s0 + $0x8] sm:$0xff]
    %v29 = vld [vmem:[%s1] sm:$0xff]
    %v30 = vld [vmem:[%s1 + $0x8] sm:$0xff]
    %v31 = vld [vmem:[%s1 + $0x10] sm:$0xff]
    %v32 = vld [vmem:[%s1 + $0x18] sm:$0xff]
    %v33 = vld [vmem:[%s2] sm:$0xff]
    %v34 = vld [vmem:[%s2 + $0x8] sm:$0xff]
    %v35 = vld [vmem:[%s2 + $0x10] sm:$0xff]
    %v36 = vld [vmem:[%s2 + $0x18] sm:$0xff]
    %38 = vset.pattern.permute.xlu0 0
    %39 = vperm.xlu0 %38, %v33
    %v40 = vpop.permute.xlu0 %39
    %43 = vset.pattern.permute.xlu0 0
    %44 = vperm.xlu0 %43, %v34
    %v45 = vpop.permute.xlu0 %44
    %48 = vset.pattern.permute.xlu0 0
    %49 = vperm.xlu0 %48, %v35
    %v50 = vpop.permute.xlu0 %49
    %53 = vset.pattern.permute.xlu0 0
    %54 = vperm.xlu0 %53, %v36
    %v55 = vpop.permute.xlu0 %54
    %v59 = vcombine.high %v27, %v27
    %v60 = vcombine.high %v28, %v28
    %vm61 = vcmask 31744
    %v63 = vsel %vm61, %v29, 0
    %v66 = vsel %vm61, %v30, 0
    %v69 = vsel %vm61, %v31, 0
    %v72 = vsel %vm61, %v32, 0
    %vm74 = vcmask 1043456
    %v75 = vsel %vm74, %v27, 0
    %v77 = vsel %vm74, %v59, 0
    %v79 = vsel %vm74, %v28, 0
    %v81 = vsel %vm74, %v60, 0
    %83 = vmatprep.subr.mxu0 0.0
    %84 = vmatpush1.msra.mxu0 0.0
    %85 = vmatprep.subr.mxu0 0.0
    %86 = vmatpush1.msra.mxu0 0.0
    %87 = vmatprep.subr.mxu0 0.0
    %88 = vmatpush1.msra.mxu0 0.0
    %89 = vmatprep.subr.mxu0 0.0
    %90 = vmatpush1.msra.mxu0 0.0
    %91 = vmatprep.subr.mxu0 0.0
    %92 = vmatpush1.msra.mxu0 0.0
    %93 = vmatprep.subr.mxu0 0.0
    %94 = vmatpush1.msra.mxu0 0.0
    %95 = vmatprep.subr.mxu0 0.0
    %96 = vmatpush1.msra.mxu0 0.0
    %97 = vmatprep.subr.mxu0 0.0
    %98 = vmatpush1.msra.mxu0 0.0
    %99 = vmatprep.subr.mxu0 0.0
    %100 = vmatpush1.msra.mxu0 0.0
    %101 = vmatprep.subr.mxu0 0.0
    %102 = vmatpush1.msra.mxu0 0.0
    %103 = vmatprep.subr.mxu0 0.0
    %104 = vmatpush1.msra.mxu0 0.0
    %105 = vmatprep.subr.mxu0 0.0
    %106 = vmatpush1.msra.mxu0 0.0
    %107 = vmatprep.subr.mxu0 0.0
    %108 = vmatpush1.msra.mxu0 0.0
    %109 = vmatprep.subr.mxu0 0.0
    %110 = vmatpush1.msra.mxu0 0.0
    %111 = vmatprep.subr.mxu0 0.0
    %112 = vmatpush1.msra.mxu0 0.0
    %113 = vmatprep.subr.mxu0 %v77
    %114 = vmatpush1.msra.mxu0 %v75
    %115 = vmatprep.subr.mxu0 0.0
    %116 = vmatpush2.msra.mxu0 0.0
    %117 = vmatprep.subr.mxu0 0.0
    %118 = vmatpush2.msra.mxu0 0.0
    %119 = vmatprep.subr.mxu0 0.0
    %120 = vmatpush2.msra.mxu0 0.0
    %121 = vmatprep.subr.mxu0 0.0
    %122 = vmatpush2.msra.mxu0 0.0
    %123 = vmatprep.subr.mxu0 0.0
    %124 = vmatpush2.msra.mxu0 0.0
    %125 = vmatprep.subr.mxu0 0.0
    %126 = vmatpush2.msra.mxu0 0.0
    %127 = vmatprep.subr.mxu0 0.0
    %128 = vmatpush2.msra.mxu0 0.0
    %129 = vmatprep.subr.mxu0 0.0
    %130 = vmatpush2.msra.mxu0 0.0
    %131 = vmatprep.subr.mxu0 0.0
    %132 = vmatpush2.msra.mxu0 0.0
    %133 = vmatprep.subr.mxu0 0.0
    %134 = vmatpush2.msra.mxu0 0.0
    %135 = vmatprep.subr.mxu0 0.0
    %136 = vmatpush2.msra.mxu0 0.0
    %137 = vmatprep.subr.mxu0 0.0
    %138 = vmatpush2.msra.mxu0 0.0
    %139 = vmatprep.subr.mxu0 0.0
    %140 = vmatpush2.msra.mxu0 0.0
    %141 = vmatprep.subr.mxu0 0.0
    %142 = vmatpush2.msra.mxu0 0.0
    %143 = vmatprep.subr.mxu0 0.0
    %144 = vmatpush2.msra.mxu0 0.0
    %145 = vmatprep.subr.mxu0 0.0
    %146 = vmatpush2.msra.mxu0 0.0
    %147 = vmatprep.mubr.f32.mxu0 0.0
    %148 = vmatmul.mubr.f32.gmra.mxu0 %v63
    %v149 = vpop.f32.mrf.mxu0
    %v150 = vadd.f32 %v40, %v149
    %v151 = vpop.f32.mrf.mxu0
    %v152 = vadd.f32 %v40, %v151
    %153 = vmatprep.mubr.f32.mxu0 0.0
    %154 = vmatmul.mubr.f32.gmra.mxu0 %v66
    %v155 = vpop.f32.mrf.mxu0
    %v156 = vadd.f32 %v45, %v155
    %v157 = vpop.f32.mrf.mxu0
    %v158 = vadd.f32 %v45, %v157
    %159 = vmatprep.mubr.f32.mxu0 0.0
    %160 = vmatmul.mubr.f32.gmra.mxu0 %v69
    %v161 = vpop.f32.mrf.mxu0
    %v162 = vadd.f32 %v50, %v161
    %v163 = vpop.f32.mrf.mxu0
    %v164 = vadd.f32 %v50, %v163
    %165 = vmatprep.mubr.f32.mxu0 0.0
    %166 = vmatmul.mubr.f32.gmra.mxu0 %v72
    %v167 = vpop.f32.mrf.mxu0
    %v168 = vadd.f32 %v55, %v167
    %v169 = vpop.f32.mrf.mxu0
    %v170 = vadd.f32 %v55, %v169
    %171 = vdwg.mxu0
    %172 = vmatprep.subr.mxu0 0.0
    %173 = vmatpush1.msra.mxu0 0.0
    %174 = vmatprep.subr.mxu0 0.0
    %175 = vmatpush1.msra.mxu0 0.0
    %176 = vmatprep.subr.mxu0 0.0
    %177 = vmatpush1.msra.mxu0 0.0
    %178 = vmatprep.subr.mxu0 0.0
    %179 = vmatpush1.msra.mxu0 0.0
    %180 = vmatprep.subr.mxu0 0.0
    %181 = vmatpush1.msra.mxu0 0.0
    %182 = vmatprep.subr.mxu0 0.0
    %183 = vmatpush1.msra.mxu0 0.0
    %184 = vmatprep.subr.mxu0 0.0
    %185 = vmatpush1.msra.mxu0 0.0
    %186 = vmatprep.subr.mxu0 0.0
    %187 = vmatpush1.msra.mxu0 0.0
    %188 = vmatprep.subr.mxu0 0.0
    %189 = vmatpush1.msra.mxu0 0.0
    %190 = vmatprep.subr.mxu0 0.0
    %191 = vmatpush1.msra.mxu0 0.0
    %192 = vmatprep.subr.mxu0 0.0
    %193 = vmatpush1.msra.mxu0 0.0
    %194 = vmatprep.subr.mxu0 0.0
    %195 = vmatpush1.msra.mxu0 0.0
    %196 = vmatprep.subr.mxu0 0.0
    %197 = vmatpush1.msra.mxu0 0.0
    %198 = vmatprep.subr.mxu0 0.0
    %199 = vmatpush1.msra.mxu0 0.0
    %200 = vmatprep.subr.mxu0 0.0
    %201 = vmatpush1.msra.mxu0 0.0
    %202 = vmatprep.subr.mxu0 %v81
    %203 = vmatpush1.msra.mxu0 %v79
    %204 = vmatprep.subr.mxu0 0.0
    %205 = vmatpush2.msra.mxu0 0.0
    %206 = vmatprep.subr.mxu0 0.0
    %207 = vmatpush2.msra.mxu0 0.0
    %208 = vmatprep.subr.mxu0 0.0
    %209 = vmatpush2.msra.mxu0 0.0
    %210 = vmatprep.subr.mxu0 0.0
    %211 = vmatpush2.msra.mxu0 0.0
    %212 = vmatprep.subr.mxu0 0.0
    %213 = vmatpush2.msra.mxu0 0.0
    %214 = vmatprep.subr.mxu0 0.0
    %215 = vmatpush2.msra.mxu0 0.0
    %216 = vmatprep.subr.mxu0 0.0
    %217 = vmatpush2.msra.mxu0 0.0
    %218 = vmatprep.subr.mxu0 0.0
    %219 = vmatpush2.msra.mxu0 0.0
    %220 = vmatprep.subr.mxu0 0.0
    %221 = vmatpush2.msra.mxu0 0.0
    %222 = vmatprep.subr.mxu0 0.0
    %223 = vmatpush2.msra.mxu0 0.0
    %224 = vmatprep.subr.mxu0 0.0
    %225 = vmatpush2.msra.mxu0 0.0
    %226 = vmatprep.subr.mxu0 0.0
    %227 = vmatpush2.msra.mxu0 0.0
    %228 = vmatprep.subr.mxu0 0.0
    %229 = vmatpush2.msra.mxu0 0.0
    %230 = vmatprep.subr.mxu0 0.0
    %231 = vmatpush2.msra.mxu0 0.0
    %232 = vmatprep.subr.mxu0 0.0
    %233 = vmatpush2.msra.mxu0 0.0
    %234 = vmatprep.subr.mxu0 0.0
    %235 = vmatpush2.msra.mxu0 0.0
    %236 = vmatprep.mubr.f32.mxu0 0.0
    %237 = vmatmul.mubr.f32.gmra.mxu0 %v63
    %v238 = vpop.f32.mrf.mxu0
    %v239 = vadd.f32 %v40, %v238
    %v240 = vpop.f32.mrf.mxu0
    %v241 = vadd.f32 %v40, %v240
    %242 = vmatprep.mubr.f32.mxu0 0.0
    %243 = vmatmul.mubr.f32.gmra.mxu0 %v66
    %v244 = vpop.f32.mrf.mxu0
    %v245 = vadd.f32 %v45, %v244
    %v246 = vpop.f32.mrf.mxu0
    %v247 = vadd.f32 %v45, %v246
    %248 = vmatprep.mubr.f32.mxu0 0.0
    %249 = vmatmul.mubr.f32.gmra.mxu0 %v69
    %v250 = vpop.f32.mrf.mxu0
    %v251 = vadd.f32 %v50, %v250
    %v252 = vpop.f32.mrf.mxu0
    %v253 = vadd.f32 %v50, %v252
    %254 = vmatprep.mubr.f32.mxu0 0.0
    %255 = vmatmul.mubr.f32.gmra.mxu0 %v72
    %v256 = vpop.f32.mrf.mxu0
    %v257 = vadd.f32 %v55, %v256
    %v258 = vpop.f32.mrf.mxu0
    %v259 = vadd.f32 %v55, %v258
    %260 = vdwg.mxu0
    %v261 = vmax.f32 %v150, 0.0
    %v262 = vmax.f32 %v152, 0.0
    %v263 = vmax.f32 %v239, 0.0
    %v264 = vmax.f32 %v241, 0.0
    %v265 = vmax.f32 %v156, 0.0
    %v266 = vmax.f32 %v158, 0.0
    %v267 = vmax.f32 %v245, 0.0
    %v268 = vmax.f32 %v247, 0.0
    %v269 = vmax.f32 %v162, 0.0
    %v270 = vmax.f32 %v164, 0.0
    %v271 = vmax.f32 %v251, 0.0
    %v272 = vmax.f32 %v253, 0.0
    %v273 = vmax.f32 %v168, 0.0
    %v274 = vmax.f32 %v170, 0.0
    %v275 = vmax.f32 %v257, 0.0
    %v276 = vmax.f32 %v259, 0.0
    %v277 = vld [vmem:[%s3] sm:$0xff]
    %v278 = vld [vmem:[%s3 + $0x8] sm:$0xff]
    %v279 = vld [vmem:[%s3 + $0x10] sm:$0xff]
    %v280 = vld [vmem:[%s3 + $0x18] sm:$0xff]
    %v281 = vld [vmem:[%s4] sm:$0xff]
    %v282 = vld [vmem:[%s4 + $0x8] sm:$0xff]
    %v283 = vld [vmem:[%s4 + $0x10] sm:$0xff]
    %v284 = vld [vmem:[%s4 + $0x18] sm:$0xff]
    %286 = vset.pattern.permute.xlu0 0
    %287 = vperm.xlu0 %286, %v281
    %v288 = vpop.permute.xlu0 %287
    %291 = vset.pattern.permute.xlu0 0
    %292 = vperm.xlu0 %291, %v282
    %v293 = vpop.permute.xlu0 %292
    %296 = vset.pattern.permute.xlu0 0
    %297 = vperm.xlu0 %296, %v283
    %v298 = vpop.permute.xlu0 %297
    %301 = vset.pattern.permute.xlu0 0
    %302 = vperm.xlu0 %301, %v284
    %v303 = vpop.permute.xlu0 %302
    %vm305 = vcmask 261120
    %v307 = vsel %vm305, %v277, 0
    %v310 = vsel %vm305, %v278, 0
    %v313 = vsel %vm305, %v279, 0
    %v316 = vsel %vm305, %v280, 0
    %318 = vmatprep.subr.mxu0 0.0
    %319 = vmatpush1.msra.mxu0 0.0
    %320 = vmatprep.subr.mxu0 0.0
    %321 = vmatpush1.msra.mxu0 0.0
    %322 = vmatprep.subr.mxu0 0.0
    %323 = vmatpush1.msra.mxu0 0.0
    %324 = vmatprep.subr.mxu0 0.0
    %325 = vmatpush1.msra.mxu0 0.0
    %326 = vmatprep.subr.mxu0 0.0
    %327 = vmatpush1.msra.mxu0 0.0
    %328 = vmatprep.subr.mxu0 0.0
    %329 = vmatpush1.msra.mxu0 0.0
    %330 = vmatprep.subr.mxu0 0.0
    %331 = vmatpush1.msra.mxu0 0.0
    %332 = vmatprep.subr.mxu0 0.0
    %333 = vmatpush1.msra.mxu0 0.0
    %334 = vmatprep.subr.mxu0 0.0
    %335 = vmatpush1.msra.mxu0 0.0
    %336 = vmatprep.subr.mxu0 0.0
    %337 = vmatpush1.msra.mxu0 0.0
    %338 = vmatprep.subr.mxu0 0.0
    %339 = vmatpush1.msra.mxu0 0.0
    %340 = vmatprep.subr.mxu0 0.0
    %341 = vmatpush1.msra.mxu0 0.0
    %342 = vmatprep.subr.mxu0 %v274
    %343 = vmatpush1.msra.mxu0 %v273
    %344 = vmatprep.subr.mxu0 %v270
    %345 = vmatpush1.msra.mxu0 %v269
    %346 = vmatprep.subr.mxu0 %v266
    %347 = vmatpush1.msra.mxu0 %v265
    %348 = vmatprep.subr.mxu0 %v262
    %349 = vmatpush1.msra.mxu0 %v261
    %350 = vmatprep.subr.mxu0 0.0
    %351 = vmatpush2.msra.mxu0 0.0
    %352 = vmatprep.subr.mxu0 0.0
    %353 = vmatpush2.msra.mxu0 0.0
    %354 = vmatprep.subr.mxu0 0.0
    %355 = vmatpush2.msra.mxu0 0.0
    %356 = vmatprep.subr.mxu0 0.0
    %357 = vmatpush2.msra.mxu0 0.0
    %358 = vmatprep.subr.mxu0 0.0
    %359 = vmatpush2.msra.mxu0 0.0
    %360 = vmatprep.subr.mxu0 0.0
    %361 = vmatpush2.msra.mxu0 0.0
    %362 = vmatprep.subr.mxu0 0.0
    %363 = vmatpush2.msra.mxu0 0.0
    %364 = vmatprep.subr.mxu0 0.0
    %365 = vmatpush2.msra.mxu0 0.0
    %366 = vmatprep.subr.mxu0 0.0
    %367 = vmatpush2.msra.mxu0 0.0
    %368 = vmatprep.subr.mxu0 0.0
    %369 = vmatpush2.msra.mxu0 0.0
    %370 = vmatprep.subr.mxu0 0.0
    %371 = vmatpush2.msra.mxu0 0.0
    %372 = vmatprep.subr.mxu0 0.0
    %373 = vmatpush2.msra.mxu0 0.0
    %374 = vmatprep.subr.mxu0 0.0
    %375 = vmatpush2.msra.mxu0 0.0
    %376 = vmatprep.subr.mxu0 0.0
    %377 = vmatpush2.msra.mxu0 0.0
    %378 = vmatprep.subr.mxu0 0.0
    %379 = vmatpush2.msra.mxu0 0.0
    %380 = vmatprep.subr.mxu0 0.0
    %381 = vmatpush2.msra.mxu0 0.0
    %382 = vmatprep.mubr.f32.mxu0 0.0
    %383 = vmatmul.mubr.f32.gmra.mxu0 %v307
    %v384 = vpop.f32.mrf.mxu0
    %v385 = vadd.f32 %v288, %v384
    %v386 = vpop.f32.mrf.mxu0
    %v387 = vadd.f32 %v288, %v386
    %388 = vmatprep.mubr.f32.mxu0 0.0
    %389 = vmatmul.mubr.f32.gmra.mxu0 %v310
    %v390 = vpop.f32.mrf.mxu0
    %v391 = vadd.f32 %v293, %v390
    %v392 = vpop.f32.mrf.mxu0
    %v393 = vadd.f32 %v293, %v392
    %394 = vmatprep.mubr.f32.mxu0 0.0
    %395 = vmatmul.mubr.f32.gmra.mxu0 %v313
    %v396 = vpop.f32.mrf.mxu0
    %v397 = vadd.f32 %v298, %v396
    %v398 = vpop.f32.mrf.mxu0
    %v399 = vadd.f32 %v298, %v398
    %400 = vmatprep.mubr.f32.mxu0 0.0
    %401 = vmatmul.mubr.f32.gmra.mxu0 %v316
    %v402 = vpop.f32.mrf.mxu0
    %v403 = vadd.f32 %v303, %v402
    %v404 = vpop.f32.mrf.mxu0
    %v405 = vadd.f32 %v303, %v404
    %406 = vdwg.mxu0
    %407 = vmatprep.subr.mxu0 0.0
    %408 = vmatpush1.msra.mxu0 0.0
    %409 = vmatprep.subr.mxu0 0.0
    %410 = vmatpush1.msra.mxu0 0.0
    %411 = vmatprep.subr.mxu0 0.0
    %412 = vmatpush1.msra.mxu0 0.0
    %413 = vmatprep.subr.mxu0 0.0
    %414 = vmatpush1.msra.mxu0 0.0
    %415 = vmatprep.subr.mxu0 0.0
    %416 = vmatpush1.msra.mxu0 0.0
    %417 = vmatprep.subr.mxu0 0.0
    %418 = vmatpush1.msra.mxu0 0.0
    %419 = vmatprep.subr.mxu0 0.0
    %420 = vmatpush1.msra.mxu0 0.0
    %421 = vmatprep.subr.mxu0 0.0
    %422 = vmatpush1.msra.mxu0 0.0
    %423 = vmatprep.subr.mxu0 0.0
    %424 = vmatpush1.msra.mxu0 0.0
    %425 = vmatprep.subr.mxu0 0.0
    %426 = vmatpush1.msra.mxu0 0.0
    %427 = vmatprep.subr.mxu0 0.0
    %428 = vmatpush1.msra.mxu0 0.0
    %429 = vmatprep.subr.mxu0 0.0
    %430 = vmatpush1.msra.mxu0 0.0
    %431 = vmatprep.subr.mxu0 %v276
    %432 = vmatpush1.msra.mxu0 %v275
    %433 = vmatprep.subr.mxu0 %v272
    %434 = vmatpush1.msra.mxu0 %v271
    %435 = vmatprep.subr.mxu0 %v268
    %436 = vmatpush1.msra.mxu0 %v267
    %437 = vmatprep.subr.mxu0 %v264
    %438 = vmatpush1.msra.mxu0 %v263
    %439 = vmatprep.subr.mxu0 0.0
    %440 = vmatpush2.msra.mxu0 0.0
    %441 = vmatprep.subr.mxu0 0.0
    %442 = vmatpush2.msra.mxu0 0.0
    %443 = vmatprep.subr.mxu0 0.0
    %444 = vmatpush2.msra.mxu0 0.0
    %445 = vmatprep.subr.mxu0 0.0
    %446 = vmatpush2.msra.mxu0 0.0
    %447 = vmatprep.subr.mxu0 0.0
    %448 = vmatpush2.msra.mxu0 0.0
    %449 = vmatprep.subr.mxu0 0.0
    %450 = vmatpush2.msra.mxu0 0.0
    %451 = vmatprep.subr.mxu0 0.0
    %452 = vmatpush2.msra.mxu0 0.0
    %453 = vmatprep.subr.mxu0 0.0
    %454 = vmatpush2.msra.mxu0 0.0
    %455 = vmatprep.subr.mxu0 0.0
    %456 = vmatpush2.msra.mxu0 0.0
    %457 = vmatprep.subr.mxu0 0.0
    %458 = vmatpush2.msra.mxu0 0.0
    %459 = vmatprep.subr.mxu0 0.0
    %460 = vmatpush2.msra.mxu0 0.0
    %461 = vmatprep.subr.mxu0 0.0
    %462 = vmatpush2.msra.mxu0 0.0
    %463 = vmatprep.subr.mxu0 0.0
    %464 = vmatpush2.msra.mxu0 0.0
    %465 = vmatprep.subr.mxu0 0.0
    %466 = vmatpush2.msra.mxu0 0.0
    %467 = vmatprep.subr.mxu0 0.0
    %468 = vmatpush2.msra.mxu0 0.0
    %469 = vmatprep.subr.mxu0 0.0
    %470 = vmatpush2.msra.mxu0 0.0
    %471 = vmatprep.mubr.f32.mxu0 0.0
    %472 = vmatmul.mubr.f32.gmra.mxu0 %v307
    %v473 = vpop.f32.mrf.mxu0
    %v474 = vadd.f32 %v288, %v473
    %v475 = vpop.f32.mrf.mxu0
    %v476 = vadd.f32 %v288, %v475
    %477 = vmatprep.mubr.f32.mxu0 0.0
    %478 = vmatmul.mubr.f32.gmra.mxu0 %v310
    %v479 = vpop.f32.mrf.mxu0
    %v480 = vadd.f32 %v293, %v479
    %v481 = vpop.f32.mrf.mxu0
    %v482 = vadd.f32 %v293, %v481
    %483 = vmatprep.mubr.f32.mxu0 0.0
    %484 = vmatmul.mubr.f32.gmra.mxu0 %v313
    %v485 = vpop.f32.mrf.mxu0
    %v486 = vadd.f32 %v298, %v485
    %v487 = vpop.f32.mrf.mxu0
    %v488 = vadd.f32 %v298, %v487
    %489 = vmatprep.mubr.f32.mxu0 0.0
    %490 = vmatmul.mubr.f32.gmra.mxu0 %v316
    %v491 = vpop.f32.mrf.mxu0
    %v492 = vadd.f32 %v303, %v491
    %v493 = vpop.f32.mrf.mxu0
    %v494 = vadd.f32 %v303, %v493
    %495 = vdwg.mxu0
    %v496 = vmax.f32 %v385, 0.0
    %v497 = vmax.f32 %v387, 0.0
    %v498 = vmax.f32 %v474, 0.0
    %v499 = vmax.f32 %v476, 0.0
    %v500 = vmax.f32 %v391, 0.0
    %v501 = vmax.f32 %v393, 0.0
    %v502 = vmax.f32 %v480, 0.0
    %v503 = vmax.f32 %v482, 0.0
    %v504 = vmax.f32 %v397, 0.0
    %v505 = vmax.f32 %v399, 0.0
    %v506 = vmax.f32 %v486, 0.0
    %v507 = vmax.f32 %v488, 0.0
    %v508 = vmax.f32 %v403, 0.0
    %v509 = vmax.f32 %v405, 0.0
    %v510 = vmax.f32 %v492, 0.0
    %v511 = vmax.f32 %v494, 0.0
    %v512 = vld [vmem:[%s5] sm:$0x3]
    %v513 = vld [vmem:[%s6] sm:$0x3]
    %515 = vset.pattern.permute.xlu0 0
    %516 = vperm.xlu0 %515, %v513
    %v517 = vpop.permute.xlu0 %516
    %v520 = vsel %vm305, %v512, 0
    %522 = vmatprep.subr.mxu0 0.0
    %523 = vmatpush1.msra.mxu0 0.0
    %524 = vmatprep.subr.mxu0 0.0
    %525 = vmatpush1.msra.mxu0 0.0
    %526 = vmatprep.subr.mxu0 0.0
    %527 = vmatpush1.msra.mxu0 0.0
    %528 = vmatprep.subr.mxu0 0.0
    %529 = vmatpush1.msra.mxu0 0.0
    %530 = vmatprep.subr.mxu0 0.0
    %531 = vmatpush1.msra.mxu0 0.0
    %532 = vmatprep.subr.mxu0 0.0
    %533 = vmatpush1.msra.mxu0 0.0
    %534 = vmatprep.subr.mxu0 0.0
    %535 = vmatpush1.msra.mxu0 0.0
    %536 = vmatprep.subr.mxu0 0.0
    %537 = vmatpush1.msra.mxu0 0.0
    %538 = vmatprep.subr.mxu0 0.0
    %539 = vmatpush1.msra.mxu0 0.0
    %540 = vmatprep.subr.mxu0 0.0
    %541 = vmatpush1.msra.mxu0 0.0
    %542 = vmatprep.subr.mxu0 0.0
    %543 = vmatpush1.msra.mxu0 0.0
    %544 = vmatprep.subr.mxu0 0.0
    %545 = vmatpush1.msra.mxu0 0.0
    %546 = vmatprep.subr.mxu0 %v509
    %547 = vmatpush1.msra.mxu0 %v508
    %548 = vmatprep.subr.mxu0 %v505
    %549 = vmatpush1.msra.mxu0 %v504
    %550 = vmatprep.subr.mxu0 %v501
    %551 = vmatpush1.msra.mxu0 %v500
    %552 = vmatprep.subr.mxu0 %v497
    %553 = vmatpush1.msra.mxu0 %v496
    %554 = vmatprep.subr.mxu0 0.0
    %555 = vmatpush2.msra.mxu0 0.0
    %556 = vmatprep.subr.mxu0 0.0
    %557 = vmatpush2.msra.mxu0 0.0
    %558 = vmatprep.subr.mxu0 0.0
    %559 = vmatpush2.msra.mxu0 0.0
    %560 = vmatprep.subr.mxu0 0.0
    %561 = vmatpush2.msra.mxu0 0.0
    %562 = vmatprep.subr.mxu0 0.0
    %563 = vmatpush2.msra.mxu0 0.0
    %564 = vmatprep.subr.mxu0 0.0
    %565 = vmatpush2.msra.mxu0 0.0
    %566 = vmatprep.subr.mxu0 0.0
    %567 = vmatpush2.msra.mxu0 0.0
    %568 = vmatprep.subr.mxu0 0.0
    %569 = vmatpush2.msra.mxu0 0.0
    %570 = vmatprep.subr.mxu0 0.0
    %571 = vmatpush2.msra.mxu0 0.0
    %572 = vmatprep.subr.mxu0 0.0
    %573 = vmatpush2.msra.mxu0 0.0
    %574 = vmatprep.subr.mxu0 0.0
    %575 = vmatpush2.msra.mxu0 0.0
    %576 = vmatprep.subr.mxu0 0.0
    %577 = vmatpush2.msra.mxu0 0.0
    %578 = vmatprep.subr.mxu0 0.0
    %579 = vmatpush2.msra.mxu0 0.0
    %580 = vmatprep.subr.mxu0 0.0
    %581 = vmatpush2.msra.mxu0 0.0
    %582 = vmatprep.subr.mxu0 0.0
    %583 = vmatpush2.msra.mxu0 0.0
    %584 = vmatprep.subr.mxu0 0.0
    %585 = vmatpush2.msra.mxu0 0.0
    %586 = vmatprep.mubr.f32.mxu0 0.0
    %587 = vmatmul.mubr.f32.gmra.mxu0 %v520
    %v588 = vpop.f32.mrf.mxu0
    %v589 = vadd.f32 %v517, %v588
    %v590 = vpop.f32.mrf.mxu0
    %v591 = vadd.f32 %v517, %v590
    %592 = vdwg.mxu0
    %593 = vmatprep.subr.mxu0 0.0
    %594 = vmatpush1.msra.mxu0 0.0
    %595 = vmatprep.subr.mxu0 0.0
    %596 = vmatpush1.msra.mxu0 0.0
    %597 = vmatprep.subr.mxu0 0.0
    %598 = vmatpush1.msra.mxu0 0.0
    %599 = vmatprep.subr.mxu0 0.0
    %600 = vmatpush1.msra.mxu0 0.0
    %601 = vmatprep.subr.mxu0 0.0
    %602 = vmatpush1.msra.mxu0 0.0
    %603 = vmatprep.subr.mxu0 0.0
    %604 = vmatpush1.msra.mxu0 0.0
    %605 = vmatprep.subr.mxu0 0.0
    %606 = vmatpush1.msra.mxu0 0.0
    %607 = vmatprep.subr.mxu0 0.0
    %608 = vmatpush1.msra.mxu0 0.0
    %609 = vmatprep.subr.mxu0 0.0
    %610 = vmatpush1.msra.mxu0 0.0
    %611 = vmatprep.subr.mxu0 0.0
    %612 = vmatpush1.msra.mxu0 0.0
    %613 = vmatprep.subr.mxu0 0.0
    %614 = vmatpush1.msra.mxu0 0.0
    %615 = vmatprep.subr.mxu0 0.0
    %616 = vmatpush1.msra.mxu0 0.0
    %617 = vmatprep.subr.mxu0 %v511
    %618 = vmatpush1.msra.mxu0 %v510
    %619 = vmatprep.subr.mxu0 %v507
    %620 = vmatpush1.msra.mxu0 %v506
    %621 = vmatprep.subr.mxu0 %v503
    %622 = vmatpush1.msra.mxu0 %v502
    %623 = vmatprep.subr.mxu0 %v499
    %624 = vmatpush1.msra.mxu0 %v498
    %625 = vmatprep.subr.mxu0 0.0
    %626 = vmatpush2.msra.mxu0 0.0
    %627 = vmatprep.subr.mxu0 0.0
    %628 = vmatpush2.msra.mxu0 0.0
    %629 = vmatprep.subr.mxu0 0.0
    %630 = vmatpush2.msra.mxu0 0.0
    %631 = vmatprep.subr.mxu0 0.0
    %632 = vmatpush2.msra.mxu0 0.0
    %633 = vmatprep.subr.mxu0 0.0
    %634 = vmatpush2.msra.mxu0 0.0
    %635 = vmatprep.subr.mxu0 0.0
    %636 = vmatpush2.msra.mxu0 0.0
    %637 = vmatprep.subr.mxu0 0.0
    %638 = vmatpush2.msra.mxu0 0.0
    %639 = vmatprep.subr.mxu0 0.0
    %640 = vmatpush2.msra.mxu0 0.0
    %641 = vmatprep.subr.mxu0 0.0
    %642 = vmatpush2.msra.mxu0 0.0
    %643 = vmatprep.subr.mxu0 0.0
    %644 = vmatpush2.msra.mxu0 0.0
    %645 = vmatprep.subr.mxu0 0.0
    %646 = vmatpush2.msra.mxu0 0.0
    %647 = vmatprep.subr.mxu0 0.0
    %648 = vmatpush2.msra.mxu0 0.0
    %649 = vmatprep.subr.mxu0 0.0
    %650 = vmatpush2.msra.mxu0 0.0
    %651 = vmatprep.subr.mxu0 0.0
    %652 = vmatpush2.msra.mxu0 0.0
    %653 = vmatprep.subr.mxu0 0.0
    %654 = vmatpush2.msra.mxu0 0.0
    %655 = vmatprep.subr.mxu0 0.0
    %656 = vmatpush2.msra.mxu0 0.0
    %657 = vmatprep.mubr.f32.mxu0 0.0
    %658 = vmatmul.mubr.f32.gmra.mxu0 %v520
    %v659 = vpop.f32.mrf.mxu0
    %v660 = vadd.f32 %v517, %v659
    %v661 = vpop.f32.mrf.mxu0
    %v662 = vadd.f32 %v517, %v661
    %663 = vdwg.mxu0
    %v668 = vcombine.low %v589, %v591
    %v669 = vcombine.low %v660, %v662
    %v671 = vunpack.c.l.s4 1983009808
    %v672 = vunpack.c.0.s8 %v671
    %v673 = vlaneseq
    %v674 = vshrl.u32 %v673, 7
    %v675 = vsub.s32 %v672, %v674
    %v676 = vrot.slane %v668, %v675
    %v678 = vunpack.c.l.s4 1983009808
    %v679 = vunpack.c.0.s8 %v678
    %v680 = vlaneseq
    %v681 = vshrl.u32 %v680, 7
    %v682 = vsub.s32 %v679, %v681
    %v683 = vrot.slane %v669, %v682
    %v684 = vcombine.low %v676, %v683
    %686 = vst [vmem:[#allocation2] sm:$0xff] %v684
    // Predicated region
    $region30: #{tpu_custom_call.1} parent=1 // pred_check
      _
    $region31: #{tpu_custom_call.1} parent=1 // pred_check_branch
      %688 = sbr.rel (0) target = $region33
    $region32: #{tpu_custom_call.1} parent=1 // pred_region
      %s690 = ssub.s32 128, 128
      %691 = vsyncadd [#allocation3], %s690
      %s693 = sshll.u32 [#allocation2], 4
      %s694 = int_to_ptr.vmem [resolvable:$true] %s693
      %696 = dma.vmem_to_hbm [thread:$0]  %s694, 128, %s7, [#allocation3]
    $region33: #{tpu_custom_call.1} parent=1 // pred_fallthru
      _
    // Predicated region
    $region34: #{tpu_custom_call.1} parent=1 // pred_check
      _
    $region35: #{tpu_custom_call.1} parent=1 // pred_check_branch
      %698 = sbr.rel (0) target = $region37
    $region36: #{tpu_custom_call.1} parent=1 // pred_region
      %699 = dma.done [#allocation3], 128
    $region37: #{tpu_custom_call.1} parent=1 // pred_fallthru
      _
    %700 = vsyncpa [#allocation3], 1

</llo_original>
